<compile_context>
chip_gen: v7x
topology: tpu7x:2x2x1
jax: 0.10.0
libtpu: 0.0.40
codegen_flags: <defaults>
</compile_context>

<pallas_src>
import functools
from math import sqrt

import jax
import jax.numpy as jnp
from jax.experimental import pallas as pl
from jax.experimental.pallas import tpu as pltpu

SEG = 128  # lane-aligned segment width for packed weights / biases


def layer_kernel(x_ref, w_in_ref, w_out_ref, b_in_ref, b_out_ref, bias_ref, o_ref,
                 *, hidden_dim: int):
    H = hidden_dim
    M, L = x_ref.shape                                       # M = batch_block * D rows

    x = x_ref[...].astype(jnp.float32)                       # (M, L)

    # ---- Attention: fused (lane-aligned) Q|K|V projection, one MXU push ----
    # W_in columns: [wq | wk | wv | w1], each padded to a 128-lane segment.
    qkv = (jnp.dot(x, w_in_ref[:, 0:3 * SEG], preferred_element_type=jnp.float32)
           + b_in_ref[:, 0:3 * SEG])                          # (M, 3*128)
    q = qkv[:, 0 * SEG:0 * SEG + H]                           # lane-aligned slices
    k = qkv[:, 1 * SEG:1 * SEG + H]
    v = qkv[:, 2 * SEG:2 * SEG + H]

    # One (M, M) score matmul for the whole batch-block; the additive block-diagonal
    # bias (0 within a batch, -1e30 across batches) makes the single softmax exactly
    # equivalent to Bb independent (D, D) softmaxes.
    scores = jnp.dot(q, k.T, preferred_element_type=jnp.float32) * (1.0 / sqrt(H))
    scores = scores + bias_ref[...]
    m = jnp.max(scores, axis=-1, keepdims=True)
    e = jnp.exp(scores - m)
    p = e * pl.reciprocal(jnp.sum(e, axis=-1, keepdims=True), approx=True)

    attn = jnp.dot(p, v, preferred_element_type=jnp.float32)                 # (M, H)

    # W_out columns: [wo | w2], each padded to a 128-lane segment.
    a_full = (jnp.dot(attn, w_out_ref[:, 0:SEG], preferred_element_type=jnp.float32)
              + b_out_ref[:, 0:SEG])                          # (M, 128)
    a_out = a_full[:, :L]                                     # (M, L)

    x1 = a_out + x                                            # residual 1

    # ---- FeedForward(L, H, L): Linear -> LeakyReLU(0.2) -> Linear ----
    h_full = (jnp.dot(x1, w_in_ref[:, 3 * SEG:4 * SEG], preferred_element_type=jnp.float32)
              + b_in_ref[:, 3 * SEG:4 * SEG])                 # (M, 128)
    h = h_full[:, :H]
    h = jnp.where(h > 0, h, 0.2 * h)
    f_full = (jnp.dot(h, w_out_ref[:, SEG:2 * SEG], preferred_element_type=jnp.float32)
              + b_out_ref[:, SEG:2 * SEG])                    # (M, 128)
    f = f_full[:, :L]

    o_ref[...] = (f + x1).astype(o_ref.dtype)                 # residual 2


def _pack_cols(arrs, seg=SEG):
    """Pack same-row-count arrays column-wise; each segment starts on a 128-lane
    boundary, zero padded (one DMA, aligned static slices in-kernel)."""
    rows = arrs[0].shape[0]
    packed = jnp.zeros((rows, len(arrs) * seg), arrs[0].dtype)
    for i, a in enumerate(arrs):
        assert a.shape[0] == rows and a.shape[1] <= seg
        packed = packed.at[:, i * seg:i * seg + a.shape[1]].set(a)
    return packed


def layer_forward(x, params, *, hidden_dim: int, batch_block=None):
    wq, bq, wk, bk, wv, bv, wo, bo, w1, b1, w2, b2 = params
    B, D, L = x.shape
    H = hidden_dim

    # Batches folded per grid step. Default keeps grid length >= 2 (both TCs busy on
    # v7x) while still folding batches into the matmul M dimension.
    if batch_block is None:
        batch_block = B // 2 if (B % 2 == 0 and B >= 2) else B
    Bb = batch_block
    assert B % Bb == 0, "batch_block must divide batch size"
    M = Bb * D
    assert M % 8 == 0 or Bb == B, "rows per block should be a multiple of 8"

    # Pack weights / biases into lane-aligned buffers.
    w_in = _pack_cols([wq, wk, wv, w1])        # (L, 4*128)
    w_out = _pack_cols([wo, w2])               # (H, 2*128)
    b_in = _pack_cols([bq, bk, bv, b1])        # (1, 4*128)
    b_out = _pack_cols([bo, b2])               # (1, 2*128)

    # Additive block-diagonal attention bias (0 in-batch, -1e30 cross-batch).
    batch_ids = jnp.arange(M, dtype=jnp.int32) // D
    attn_bias = jnp.where(batch_ids[:, None] == batch_ids[None, :],
                          0.0, -1e30).astype(jnp.float32)     # (M, M)

    # Fold batch into the matmul M dimension (row-major -> free reshape).
    x2 = x.reshape(B * D, L)

    grid = (B // Bb,)
    full = lambda a: pl.BlockSpec(a.shape, lambda i: (0, 0))  # fetched once

    flops = 2 * B * D * (L * 3 * H + 2 * D * H + H * L + L * H + H * L)
    bytes_accessed = 4 * (2 * x2.size + w_in.size + w_out.size
                          + b_in.size + b_out.size + attn_bias.size)
    cost = pl.CostEstimate(flops=flops,
                           transcendentals=B * D * D + B * D,
                           bytes_accessed=bytes_accessed)

    out2 = pl.pallas_call(
        functools.partial(layer_kernel, hidden_dim=H),
        out_shape=jax.ShapeDtypeStruct((B * D, L), x.dtype),
        grid_spec=pltpu.PrefetchScalarGridSpec(
            num_scalar_prefetch=0,
            grid=grid,
            in_specs=[
                pl.BlockSpec((M, L), lambda i: (i, 0)),       # x rows for this block
                full(w_in), full(w_out),
                full(b_in), full(b_out),
                full(attn_bias),
            ],
            out_specs=pl.BlockSpec((M, L), lambda i: (i, 0)),
        ),
        compiler_params=pltpu.CompilerParams(
            dimension_semantics=("parallel",)),
        cost_estimate=cost,
    )(x2, w_in, w_out, b_in, b_out, attn_bias)

    return out2.reshape(B, D, L)


def init_params(key, length: int, hidden_dim: int):
    """Deterministic synthetic parameters. Weights stored as (in, out)."""
    L, H = length, hidden_dim
    ks = jax.random.split(key, 12)
    scale_l = 1.0 / sqrt(L)
    scale_h = 1.0 / sqrt(H)
    wq = jax.random.normal(ks[0], (L, H), jnp.float32) * scale_l
    bq = jax.random.normal(ks[1], (1, H), jnp.float32) * 0.01
    wk = jax.random.normal(ks[2], (L, H), jnp.float32) * scale_l
    bk = jax.random.normal(ks[3], (1, H), jnp.float32) * 0.01
    wv = jax.random.normal(ks[4], (L, H), jnp.float32) * scale_l
    bv = jax.random.normal(ks[5], (1, H), jnp.float32) * 0.01
    wo = jax.random.normal(ks[6], (H, L), jnp.float32) * scale_h
    bo = jax.random.normal(ks[7], (1, L), jnp.float32) * 0.01
    w1 = jax.random.normal(ks[8], (L, H), jnp.float32) * scale_l
    b1 = jax.random.normal(ks[9], (1, H), jnp.float32) * 0.01
    w2 = jax.random.normal(ks[10], (H, L), jnp.float32) * scale_h
    b2 = jax.random.normal(ks[11], (1, L), jnp.float32) * 0.01
    return (wq, bq, wk, bk, wv, bv, wo, bo, w1, b1, w2, b2)


def layer_reference(x, params, *, hidden_dim: int):
    """Pure-JAX reference of the same forward (for validation)."""
    wq, bq, wk, bk, wv, bv, wo, bo, w1, b1, w2, b2 = params
    q = x @ wq + bq
    k = x @ wk + bk
    v = x @ wv + bv
    scores = jnp.einsum("bdh,beh->bde", q, k) / sqrt(hidden_dim)
    p = jax.nn.softmax(scores, axis=-1)
    attn = jnp.einsum("bde,beh->bdh", p, v)
    a_out = attn @ wo + bo
    x1 = a_out + x
    h = x1 @ w1 + b1
    h = jnp.where(h > 0, h, 0.2 * h)
    f = h @ w2 + b2
    return f + x1


if __name__ == "__main__":
    # Small shapes implied by the module: length (feature axis), dim (token axis).
    B, D, L, H = 4, 8, 16, 32   # batch, dim, length, hidden_dim

    key = jax.random.PRNGKey(0)
    k_x, k_p = jax.random.split(key)
    x = jax.random.normal(k_x, (B, D, L), jnp.float32)
    params = init_params(k_p, length=L, hidden_dim=H)

    out = layer_forward(x, params, hidden_dim=H)   # batch_block defaults to B//2=2
    out = jax.block_until_ready(out)

    ref = layer_reference(x, params, hidden_dim=H)
    assert out.shape == (B, D, L)
    # Tolerance relaxed for pl.reciprocal(approx=True) in the softmax normalization.
    assert jnp.allclose(out, ref, atol=1e-2, rtol=1e-2), (
        f"mismatch vs reference: max abs err = {jnp.max(jnp.abs(out - ref))}")

    print("KERNEL_OK")
</pallas_src>

<mosaic_0001>
module attributes {stable_mosaic.version = 11 : i64} {
  func.func @layer_kernel(%arg0: i32, %arg1: memref<16x16xf32, #tpu.memory_space<vmem>>, %arg2: memref<16x512xf32, #tpu.memory_space<vmem>>, %arg3: memref<32x256xf32, #tpu.memory_space<vmem>>, %arg4: memref<1x512xf32, #tpu.memory_space<vmem>>, %arg5: memref<1x256xf32, #tpu.memory_space<vmem>>, %arg6: memref<16x16xf32, #tpu.memory_space<vmem>>, %arg7: memref<16x16xf32, #tpu.memory_space<vmem>>) attributes {dimension_semantics = [#tpu.dimension_semantics<parallel>], iteration_bounds = array<i64: 2>, scalar_prefetch = 0 : i64, scratch_operands = 0 : i64, tpu.core_type = #tpu.core_type<tc>, window_params = [{transform_indices = @transform_0, window_bounds = array<i64: 16, 16>}, {pipeline_mode = #tpu.pipeline_mode<synchronous>, transform_indices = @transform_1, window_bounds = array<i64: 16, 512>}, {pipeline_mode = #tpu.pipeline_mode<synchronous>, transform_indices = @transform_2, window_bounds = array<i64: 32, 256>}, {pipeline_mode = #tpu.pipeline_mode<synchronous>, transform_indices = @transform_3, window_bounds = array<i64: 1, 512>}, {pipeline_mode = #tpu.pipeline_mode<synchronous>, transform_indices = @transform_4, window_bounds = array<i64: 1, 256>}, {pipeline_mode = #tpu.pipeline_mode<synchronous>, transform_indices = @transform_5, window_bounds = array<i64: 16, 16>}, {transform_indices = @transform_6, window_bounds = array<i64: 16, 16>}]} {
    %c0 = arith.constant 0 : index
    %c0_0 = arith.constant 0 : index
    %0 = vector.load %arg1[%c0, %c0_0] : memref<16x16xf32, #tpu.memory_space<vmem>>, vector<16x16xf32>
    %c0_1 = arith.constant 0 : index
    %c0_2 = arith.constant 0 : index
    %1 = vector.load %arg2[%c0_1, %c0_2] : memref<16x512xf32, #tpu.memory_space<vmem>>, vector<16x384xf32>
    %cst = arith.constant dense<0.000000e+00> : vector<16x384xf32>
    %2 = tpu.matmul %0, %1, %cst {dimension_numbers = #tpu.dot_dimension_numbers<[1], [0], [0], [1], [0, 0, 1, 1], [], []>} : vector<16x16xf32>, vector<16x384xf32>, vector<16x384xf32> -> vector<16x384xf32>
    %c0_3 = arith.constant 0 : index
    %c0_4 = arith.constant 0 : index
    %3 = vector.load %arg4[%c0_3, %c0_4] : memref<1x512xf32, #tpu.memory_space<vmem>>, vector<1x384xf32>
    %4 = vector.broadcast %3 : vector<1x384xf32> to vector<16x384xf32>
    %5 = arith.addf %2, %4 : vector<16x384xf32>
    %6 = vector.extract_strided_slice %5 {offsets = [0, 0], sizes = [16, 32], strides = [1, 1]} : vector<16x384xf32> to vector<16x32xf32>
    %7 = vector.extract_strided_slice %5 {offsets = [0, 128], sizes = [16, 32], strides = [1, 1]} : vector<16x384xf32> to vector<16x32xf32>
    %8 = vector.extract_strided_slice %5 {offsets = [0, 256], sizes = [16, 32], strides = [1, 1]} : vector<16x384xf32> to vector<16x32xf32>
    %9 = tpu.transpose %7, [1, 0] : vector<16x32xf32> -> vector<32x16xf32>
    %cst_5 = arith.constant dense<0.000000e+00> : vector<16x16xf32>
    %10 = tpu.matmul %6, %9, %cst_5 {dimension_numbers = #tpu.dot_dimension_numbers<[1], [0], [0], [1], [0, 0, 1, 1], [], []>} : vector<16x32xf32>, vector<32x16xf32>, vector<16x16xf32> -> vector<16x16xf32>
    %cst_6 = arith.constant 0.176776692 : f32
    %11 = vector.broadcast %cst_6 : f32 to vector<16x16xf32>
    %12 = arith.mulf %10, %11 : vector<16x16xf32>
    %c0_7 = arith.constant 0 : index
    %c0_8 = arith.constant 0 : index
    %13 = vector.load %arg6[%c0_7, %c0_8] : memref<16x16xf32, #tpu.memory_space<vmem>>, vector<16x16xf32>
    %14 = arith.addf %12, %13 : vector<16x16xf32>
    %cst_9 = arith.constant dense<0xFF800000> : vector<16xf32>
    %15 = vector.multi_reduction <maximumf>, %14, %cst_9 [1] : vector<16x16xf32> to vector<16xf32>
    %16 = vector.shape_cast %15 : vector<16xf32> to vector<16x1xf32>
    %17 = vector.broadcast %16 : vector<16x1xf32> to vector<16x16xf32>
    %18 = arith.subf %14, %17 : vector<16x16xf32>
    %19 = math.exp %18 : vector<16x16xf32>
    %cst_10 = arith.constant dense<0.000000e+00> : vector<16xf32>
    %20 = vector.multi_reduction <add>, %19, %cst_10 [1] : vector<16x16xf32> to vector<16xf32>
    %21 = vector.shape_cast %20 : vector<16xf32> to vector<16x1xf32>
    %22 = tpu.reciprocal %21 {approx = true} : vector<16x1xf32> -> vector<16x1xf32>
    %23 = vector.broadcast %22 : vector<16x1xf32> to vector<16x16xf32>
    %24 = arith.mulf %19, %23 : vector<16x16xf32>
    %cst_11 = arith.constant dense<0.000000e+00> : vector<16x32xf32>
    %25 = tpu.matmul %24, %8, %cst_11 {dimension_numbers = #tpu.dot_dimension_numbers<[1], [0], [0], [1], [0, 0, 1, 1], [], []>} : vector<16x16xf32>, vector<16x32xf32>, vector<16x32xf32> -> vector<16x32xf32>
    %c0_12 = arith.constant 0 : index
    %c0_13 = arith.constant 0 : index
    %26 = vector.load %arg3[%c0_12, %c0_13] : memref<32x256xf32, #tpu.memory_space<vmem>>, vector<32x128xf32>
    %cst_14 = arith.constant dense<0.000000e+00> : vector<16x128xf32>
    %27 = tpu.matmul %25, %26, %cst_14 {dimension_numbers = #tpu.dot_dimension_numbers<[1], [0], [0], [1], [0, 0, 1, 1], [], []>} : vector<16x32xf32>, vector<32x128xf32>, vector<16x128xf32> -> vector<16x128xf32>
    %c0_15 = arith.constant 0 : index
    %c0_16 = arith.constant 0 : index
    %28 = vector.load %arg5[%c0_15, %c0_16] : memref<1x256xf32, #tpu.memory_space<vmem>>, vector<1x128xf32>
    %29 = vector.broadcast %28 : vector<1x128xf32> to vector<16x128xf32>
    %30 = arith.addf %27, %29 : vector<16x128xf32>
    %31 = vector.extract_strided_slice %30 {offsets = [0, 0], sizes = [16, 16], strides = [1, 1]} : vector<16x128xf32> to vector<16x16xf32>
    %32 = arith.addf %31, %0 : vector<16x16xf32>
    %c0_17 = arith.constant 0 : index
    %c384 = arith.constant 384 : index
    %33 = vector.load %arg2[%c0_17, %c384] : memref<16x512xf32, #tpu.memory_space<vmem>>, vector<16x128xf32>
    %cst_18 = arith.constant dense<0.000000e+00> : vector<16x128xf32>
    %34 = tpu.matmul %32, %33, %cst_18 {dimension_numbers = #tpu.dot_dimension_numbers<[1], [0], [0], [1], [0, 0, 1, 1], [], []>} : vector<16x16xf32>, vector<16x128xf32>, vector<16x128xf32> -> vector<16x128xf32>
    %c0_19 = arith.constant 0 : index
    %c384_20 = arith.constant 384 : index
    %35 = vector.load %arg4[%c0_19, %c384_20] : memref<1x512xf32, #tpu.memory_space<vmem>>, vector<1x128xf32>
    %36 = vector.broadcast %35 : vector<1x128xf32> to vector<16x128xf32>
    %37 = arith.addf %34, %36 : vector<16x128xf32>
    %38 = vector.extract_strided_slice %37 {offsets = [0, 0], sizes = [16, 32], strides = [1, 1]} : vector<16x128xf32> to vector<16x32xf32>
    %cst_21 = arith.constant 0.000000e+00 : f32
    %39 = vector.broadcast %cst_21 : f32 to vector<16x32xf32>
    %40 = arith.cmpf ogt, %38, %39 : vector<16x32xf32>
    %cst_22 = arith.constant 2.000000e-01 : f32
    %41 = vector.broadcast %cst_22 : f32 to vector<16x32xf32>
    %42 = arith.mulf %41, %38 : vector<16x32xf32>
    %43 = arith.select %40, %38, %42 : vector<16x32xi1>, vector<16x32xf32>
    %c0_23 = arith.constant 0 : index
    %c128 = arith.constant 128 : index
    %44 = vector.load %arg3[%c0_23, %c128] : memref<32x256xf32, #tpu.memory_space<vmem>>, vector<32x128xf32>
    %cst_24 = arith.constant dense<0.000000e+00> : vector<16x128xf32>
    %45 = tpu.matmul %43, %44, %cst_24 {dimension_numbers = #tpu.dot_dimension_numbers<[1], [0], [0], [1], [0, 0, 1, 1], [], []>} : vector<16x32xf32>, vector<32x128xf32>, vector<16x128xf32> -> vector<16x128xf32>
    %c0_25 = arith.constant 0 : index
    %c128_26 = arith.constant 128 : index
    %46 = vector.load %arg5[%c0_25, %c128_26] : memref<1x256xf32, #tpu.memory_space<vmem>>, vector<1x128xf32>
    %47 = vector.broadcast %46 : vector<1x128xf32> to vector<16x128xf32>
    %48 = arith.addf %45, %47 : vector<16x128xf32>
    %49 = vector.extract_strided_slice %48 {offsets = [0, 0], sizes = [16, 16], strides = [1, 1]} : vector<16x128xf32> to vector<16x16xf32>
    %50 = arith.addf %49, %32 : vector<16x16xf32>
    %c0_27 = arith.constant 0 : index
    %c0_28 = arith.constant 0 : index
    %51 = vector.load %arg7[%c0_27, %c0_28] : memref<16x16xf32, #tpu.memory_space<vmem>>, vector<16x16xf32>
    tpu.vector_store %arg7[%c0_27, %c0_28], %50 {strides = array<i32>} : memref<16x16xf32, #tpu.memory_space<vmem>>, vector<16x16xf32>,
    return
  }
  func.func @transform_0(%arg0: i32) -> (i32, i32) {
    %c0_i32 = arith.constant 0 : i32
    %c0_i32_0 = arith.constant 0 : i32
    return %arg0, %c0_i32 : i32, i32
  }
  func.func @transform_1(%arg0: i32) -> (i32, i32) {
    %c0_i32 = arith.constant 0 : i32
    %c0_i32_0 = arith.constant 0 : i32
    %c0_i32_1 = arith.constant 0 : i32
    return %c0_i32, %c0_i32_0 : i32, i32
  }
  func.func @transform_2(%arg0: i32) -> (i32, i32) {
    %c0_i32 = arith.constant 0 : i32
    %c0_i32_0 = arith.constant 0 : i32
    %c0_i32_1 = arith.constant 0 : i32
    return %c0_i32, %c0_i32_0 : i32, i32
  }
  func.func @transform_3(%arg0: i32) -> (i32, i32) {
    %c0_i32 = arith.constant 0 : i32
    %c0_i32_0 = arith.constant 0 : i32
    %c0_i32_1 = arith.constant 0 : i32
    return %c0_i32, %c0_i32_0 : i32, i32
  }
  func.func @transform_4(%arg0: i32) -> (i32, i32) {
    %c0_i32 = arith.constant 0 : i32
    %c0_i32_0 = arith.constant 0 : i32
    %c0_i32_1 = arith.constant 0 : i32
    return %c0_i32, %c0_i32_0 : i32, i32
  }
  func.func @transform_5(%arg0: i32) -> (i32, i32) {
    %c0_i32 = arith.constant 0 : i32
    %c0_i32_0 = arith.constant 0 : i32
    %c0_i32_1 = arith.constant 0 : i32
    return %c0_i32, %c0_i32_0 : i32, i32
  }
  func.func @transform_6(%arg0: i32) -> (i32, i32) {
    %c0_i32 = arith.constant 0 : i32
    %c0_i32_0 = arith.constant 0 : i32
    return %arg0, %c0_i32 : i32, i32
  }
}

</mosaic_0001>

<llo_original>
// kernel: tpu_custom_call.1
$region0: #{tpu_custom_call.1}
  #allocation0 [shape = 'u32[]', space=smem, size = 0x4, offset = 0x4, fixed_abs, tag = 'smem constant byte address 0x4 - core index']
  #allocation1 [shape = 'u32[144,128]{1,0:T(1,128)}', space=vmem, size = 0x12000, scoped, tag = 'internal scratch']
  %s0 = inlined_call_operand.vmem [shape: f32[32,16], index: 0, kind: input, shape index: {}]
  %s1 = inlined_call_operand.hbm [shape: f32[16,512], index: 1, kind: input, shape index: {}]
  %s2 = inlined_call_operand.hbm [shape: f32[32,256], index: 2, kind: input, shape index: {}]
  %s3 = inlined_call_operand.vmem [shape: f32[1,512], index: 3, kind: input, shape index: {}]
  %s4 = inlined_call_operand.vmem [shape: f32[1,256], index: 4, kind: input, shape index: {}]
  %s5 = inlined_call_operand.vmem [shape: f32[16,16], index: 5, kind: input, shape index: {}]
  %s6 = inlined_call_operand.vmem [shape: f32[32,16], index: 6, kind: output, shape index: {}]
  %s7 = sld [smem:[#allocation0]]
  $region65: #{tpu_custom_call.1} parent=0
    _
  %s9 = ssub.s32 1, %s7
  %s10 = scalar_select 0, %s9, %s7
  $region1: #{tpu_custom_call.1} parent=0
    #allocation2 [shape = 'u8[32768]{0}', space=vmem, size = 0x8000, scoped, tag = 'input window, operand 1, single buffered']
    #allocation3 [shape = 's32[2]{0}', space=sflag, size = 0x8, scoped, tag = 'scoped memory for tpu_custom_call.1']
    #allocation4 [shape = 'u8[32768]{0}', space=vmem, size = 0x8000, scoped, tag = 'input window, operand 2, single buffered']
    #allocation5 [shape = 's32[1]{0}', space=sflag, size = 0x4, scoped, tag = 'scoped memory for tpu_custom_call.1']
    %11 = vsyncpa [#allocation3], 0
    %12 = vsyncpa [#allocation5], 0
    loop: start=0, step=1, limit=4
    $region2: #{tpu_custom_call.1} parent=1 // loop_pre_header
      _
    $region3: #{tpu_custom_call.1} parent=1 // loop_header
      %s14 = sphi 0, %s18
      %p15 = scmp.ge.s32.totalorder %s14, 4
      %s24 = sphi 0, %s26
      %s27 = sphi 0, %s24
      %s28 = sphi 0, %s27
      %s44 = sphi 0, %s28
      %s48 = sphi 0, %s48
      %s50 = sphi 0, %s48
      %s51 = sphi 0, %s50
      %s65 = sphi 0, %s51
      %s69 = sphi 0, %s69
      %s71 = sphi 0, %s69
      %s72 = sphi 0, %s71
      %s86 = sphi 0, %s72
      %s90 = sphi 0, %s90
      %s92 = sphi 0, %s90
      %s93 = sphi 0, %s92
      %s107 = sphi 0, %s93
      %s111 = sphi 0, %s111
      %s113 = sphi 0, %s111
      %s114 = sphi 0, %s113
      %s128 = sphi 0, %s114
      %s132 = sphi 0, %s132
      %s134 = sphi 0, %s132
      %s135 = sphi 0, %s134
      %s149 = sphi 0, %s135
      %s155 = sphi 0, %s157
      %s158 = sphi 0, %s155
      %s159 = sphi 0, %s158
      %s175 = sphi 0, %s159
    $region4: #{tpu_custom_call.1} parent=1 // loop_header_branch
      %17 = sbr.rel (%p15) target = $region8
    $region5: #{tpu_custom_call.1} parent=1 // loop_body
      %s19 = ssub.s32 %s14, 1
      %s20 = ssub.s32 %s14, 2
      %s21 = sadd.s32 %s14, 1
      %s22 = ssub.s32 %s14, %s21
      %p23 = scmp.eq.s32.totalorder %s22, 0
      %s25 = sadd.s32 %s24, 1
      %s26 = scalar_select %p23, %s24, %s25
      %p29 = pneg %p23
      %p30 = scmp.eq.s32.totalorder %s14, 1
      %p31 = por %p29, %p30
      %p32 = scmp.ne.s32.totalorder %s24, %s27
      %p33 = scmp.eq.s32.totalorder %s14, 0
      %p34 = por %p32, %p33
      %p35 = scmp.ne.s32.totalorder %s24, %s27
      %p36 = scmp.eq.s32.totalorder %s19, 1
      %p37 = por %p35, %p36
      %p38 = scmp.ne.s32.totalorder %s27, %s28
      %p39 = scmp.eq.s32.totalorder %s19, 0
      %p40 = por %p38, %p39
      %p41 = scmp.ne.s32.totalorder %s27, %s28
      %p42 = scmp.eq.s32.totalorder %s20, 1
      %p43 = por %p41, %p42
      %p45 = scmp.ne.s32.totalorder %s28, %s44
      %p46 = scmp.eq.s32.totalorder %s20, 0
      %p47 = por %p45, %p46
      %s49 = sadd.s32 %s48, 1
      %p52 = scmp.eq.s32.totalorder %s14, 1
      %p53 = scmp.ne.s32.totalorder %s48, %s50
      %p54 = scmp.eq.s32.totalorder %s14, 0
      %p55 = por %p53, %p54
      %p56 = scmp.ne.s32.totalorder %s48, %s50
      %p57 = scmp.eq.s32.totalorder %s19, 1
      %p58 = por %p56, %p57
      %p59 = scmp.ne.s32.totalorder %s50, %s51
      %p60 = scmp.eq.s32.totalorder %s19, 0
      %p61 = por %p59, %p60
      %p62 = scmp.ne.s32.totalorder %s50, %s51
      %p63 = scmp.eq.s32.totalorder %s20, 1
      %p64 = por %p62, %p63
      %p66 = scmp.ne.s32.totalorder %s51, %s65
      %p67 = scmp.eq.s32.totalorder %s20, 0
      %p68 = por %p66, %p67
      %s70 = sadd.s32 %s69, 1
      %p73 = scmp.eq.s32.totalorder %s14, 1
      %p74 = scmp.ne.s32.totalorder %s69, %s71
      %p75 = scmp.eq.s32.totalorder %s14, 0
      %p76 = por %p74, %p75
      %p77 = scmp.ne.s32.totalorder %s69, %s71
      %p78 = scmp.eq.s32.totalorder %s19, 1
      %p79 = por %p77, %p78
      %p80 = scmp.ne.s32.totalorder %s71, %s72
      %p81 = scmp.eq.s32.totalorder %s19, 0
      %p82 = por %p80, %p81
      %p83 = scmp.ne.s32.totalorder %s71, %s72
      %p84 = scmp.eq.s32.totalorder %s20, 1
      %p85 = por %p83, %p84
      %p87 = scmp.ne.s32.totalorder %s72, %s86
      %p88 = scmp.eq.s32.totalorder %s20, 0
      %p89 = por %p87, %p88
      %s91 = sadd.s32 %s90, 1
      %p94 = scmp.eq.s32.totalorder %s14, 1
      %p95 = scmp.ne.s32.totalorder %s90, %s92
      %p96 = scmp.eq.s32.totalorder %s14, 0
      %p97 = por %p95, %p96
      %p98 = scmp.ne.s32.totalorder %s90, %s92
      %p99 = scmp.eq.s32.totalorder %s19, 1
      %p100 = por %p98, %p99
      %p101 = scmp.ne.s32.totalorder %s92, %s93
      %p102 = scmp.eq.s32.totalorder %s19, 0
      %p103 = por %p101, %p102
      %p104 = scmp.ne.s32.totalorder %s92, %s93
      %p105 = scmp.eq.s32.totalorder %s20, 1
      %p106 = por %p104, %p105
      %p108 = scmp.ne.s32.totalorder %s93, %s107
      %p109 = scmp.eq.s32.totalorder %s20, 0
      %p110 = por %p108, %p109
      %s112 = sadd.s32 %s111, 1
      %p115 = scmp.eq.s32.totalorder %s14, 1
      %p116 = scmp.ne.s32.totalorder %s111, %s113
      %p117 = scmp.eq.s32.totalorder %s14, 0
      %p118 = por %p116, %p117
      %p119 = scmp.ne.s32.totalorder %s111, %s113
      %p120 = scmp.eq.s32.totalorder %s19, 1
      %p121 = por %p119, %p120
      %p122 = scmp.ne.s32.totalorder %s113, %s114
      %p123 = scmp.eq.s32.totalorder %s19, 0
      %p124 = por %p122, %p123
      %p125 = scmp.ne.s32.totalorder %s113, %s114
      %p126 = scmp.eq.s32.totalorder %s20, 1
      %p127 = por %p125, %p126
      %p129 = scmp.ne.s32.totalorder %s114, %s128
      %p130 = scmp.eq.s32.totalorder %s20, 0
      %p131 = por %p129, %p130
      %s133 = sadd.s32 %s132, 1
      %p136 = scmp.eq.s32.totalorder %s14, 1
      %p137 = scmp.ne.s32.totalorder %s132, %s134
      %p138 = scmp.eq.s32.totalorder %s14, 0
      %p139 = por %p137, %p138
      %p140 = scmp.ne.s32.totalorder %s132, %s134
      %p141 = scmp.eq.s32.totalorder %s19, 1
      %p142 = por %p140, %p141
      %p143 = scmp.ne.s32.totalorder %s134, %s135
      %p144 = scmp.eq.s32.totalorder %s19, 0
      %p145 = por %p143, %p144
      %p146 = scmp.ne.s32.totalorder %s134, %s135
      %p147 = scmp.eq.s32.totalorder %s20, 1
      %p148 = por %p146, %p147
      %p150 = scmp.ne.s32.totalorder %s135, %s149
      %p151 = scmp.eq.s32.totalorder %s20, 0
      %p152 = por %p150, %p151
      %s153 = ssub.s32 %s14, %s21
      %p154 = scmp.eq.s32.totalorder %s153, 0
      %s156 = sadd.s32 %s155, 1
      %s157 = scalar_select %p154, %s155, %s156
      %p160 = pneg %p154
      %p161 = scmp.eq.s32.totalorder %s14, 1
      %p162 = por %p160, %p161
      %p163 = scmp.ne.s32.totalorder %s155, %s158
      %p164 = scmp.eq.s32.totalorder %s14, 0
      %p165 = por %p163, %p164
      %p166 = scmp.ne.s32.totalorder %s155, %s158
      %p167 = scmp.eq.s32.totalorder %s19, 1
      %p168 = por %p166, %p167
      %p169 = scmp.ne.s32.totalorder %s158, %s159
      %p170 = scmp.eq.s32.totalorder %s19, 0
      %p171 = por %p169, %p170
      %p172 = scmp.ne.s32.totalorder %s158, %s159
      %p173 = scmp.eq.s32.totalorder %s20, 1
      %p174 = por %p172, %p173
      %p176 = scmp.ne.s32.totalorder %s159, %s175
      %p177 = scmp.eq.s32.totalorder %s20, 0
      %p178 = por %p176, %p177
      %p179 = scmp.le.s32.totalorder 1, %s14
      %p180 = scmp.lt.s32.totalorder %s14, 3
      %p181 = pnand %p179, %p180
      %p182 = pneg %p181
      // Predicated region
      $region9: #{tpu_custom_call.1} parent=5 // pred_check
        _
      $region10: #{tpu_custom_call.1} parent=5 // pred_check_branch
        %184 = sbr.rel (%p181) target = $region12
      $region11: #{tpu_custom_call.1} parent=5 // pred_region
        %s185 = ssub.s32 %s14, 1
        // Predicated region
        $region13: #{tpu_custom_call.1} parent=11 // pred_check
          %p186 = pneg %p61
        $region14: #{tpu_custom_call.1} parent=11 // pred_check_branch
          %188 = sbr.rel (%p186) target = $region16
        $region15: #{tpu_custom_call.1} parent=11 // pred_region
          %s190 = ssub.s32 1024, 1024
          %191 = vsyncadd [#allocation3], %s190
          %s192 = sshll.u32 [#allocation2], 4
          %s193 = int_to_ptr.vmem [resolvable:$true] %s192
          %198 = dma.hbm_to_vmem [thread:$0]  %s1, 1024, %s193, [#allocation3], 512, 512, 32
        $region16: #{tpu_custom_call.1} parent=11 // pred_fallthru
          _
        // Predicated region
        $region17: #{tpu_custom_call.1} parent=11 // pred_check
          %p199 = pneg %p82
        $region18: #{tpu_custom_call.1} parent=11 // pred_check_branch
          %201 = sbr.rel (%p199) target = $region20
        $region19: #{tpu_custom_call.1} parent=11 // pred_region
          %s203 = ssub.s32 1024, 1024
          %204 = vsyncadd [#allocation5], %s203
          %s205 = sshll.u32 [#allocation4], 4
          %s206 = int_to_ptr.vmem [resolvable:$true] %s205
          %211 = dma.hbm_to_vmem [thread:$0]  %s2, 1024, %s206, [#allocation5], 256, 256, 16
        $region20: #{tpu_custom_call.1} parent=11 // pred_fallthru
          _
        // Predicated region
        $region21: #{tpu_custom_call.1} parent=11 // pred_check
          %p212 = pneg %p103
        $region22: #{tpu_custom_call.1} parent=11 // pred_check_branch
          %214 = sbr.rel (%p212) target = $region24
        $region23: #{tpu_custom_call.1} parent=11 // pred_region
          _
        $region24: #{tpu_custom_call.1} parent=11 // pred_fallthru
          _
        // Predicated region
        $region25: #{tpu_custom_call.1} parent=11 // pred_check
          %p215 = pneg %p124
        $region26: #{tpu_custom_call.1} parent=11 // pred_check_branch
          %217 = sbr.rel (%p215) target = $region28
        $region27: #{tpu_custom_call.1} parent=11 // pred_region
          _
        $region28: #{tpu_custom_call.1} parent=11 // pred_fallthru
          _
        // Predicated region
        $region29: #{tpu_custom_call.1} parent=11 // pred_check
          %p218 = pneg %p145
        $region30: #{tpu_custom_call.1} parent=11 // pred_check_branch
          %220 = sbr.rel (%p218) target = $region32
        $region31: #{tpu_custom_call.1} parent=11 // pred_region
          _
        $region32: #{tpu_custom_call.1} parent=11 // pred_fallthru
          _
      $region12: #{tpu_custom_call.1} parent=5 // pred_fallthru
        _
      %p221 = scmp.lt.s32.totalorder %s14, 2
      // Predicated region
      $region33: #{tpu_custom_call.1} parent=5 // pred_check
        %p222 = pneg %p221
      $region34: #{tpu_custom_call.1} parent=5 // pred_check_branch
        %224 = sbr.rel (%p222) target = $region36
      $region35: #{tpu_custom_call.1} parent=5 // pred_region
        // Predicated region
        $region37: #{tpu_custom_call.1} parent=35 // pred_check
          %p225 = pneg %p34
        $region38: #{tpu_custom_call.1} parent=35 // pred_check_branch
          %227 = sbr.rel (%p225) target = $region40
        $region39: #{tpu_custom_call.1} parent=35 // pred_region
          %s228 = smul.u32 2, %s14
          %p229 = scmp.lt.s32.totalorder %s228, 3
          %s230 = scalar_select %p229, %s228, 3
          %s231 = smul.addr %s230, 8
          %s232 = scalar_lea.vmem %s0, %s231
          %s233 = smul.u32 2, %s14
        $region40: #{tpu_custom_call.1} parent=35 // pred_fallthru
          _
      $region36: #{tpu_custom_call.1} parent=5 // pred_fallthru
        _
      %p234 = scmp.le.s32.totalorder 1, %s14
      %p235 = scmp.lt.s32.totalorder %s14, 3
      %p236 = pnand %p234, %p235
      %p237 = pneg %p236
      // Predicated region
      $region41: #{tpu_custom_call.1} parent=5 // pred_check
        _
      $region42: #{tpu_custom_call.1} parent=5 // pred_check_branch
        %239 = sbr.rel (%p236) target = $region44
      $region43: #{tpu_custom_call.1} parent=5 // pred_region
        %s240 = ssub.s32 %s14, 1
        // Predicated region
        $region45: #{tpu_custom_call.1} parent=43 // pred_check
          %p241 = pneg %p61
        $region46: #{tpu_custom_call.1} parent=43 // pred_check_branch
          %243 = sbr.rel (%p241) target = $region48
        $region47: #{tpu_custom_call.1} parent=43 // pred_region
          %244 = dma.done [#allocation3], 1024
        $region48: #{tpu_custom_call.1} parent=43 // pred_fallthru
          _
        // Predicated region
        $region49: #{tpu_custom_call.1} parent=43 // pred_check
          %p245 = pneg %p82
        $region50: #{tpu_custom_call.1} parent=43 // pred_check_branch
          %247 = sbr.rel (%p245) target = $region52
        $region51: #{tpu_custom_call.1} parent=43 // pred_region
          %248 = dma.done [#allocation5], 1024
        $region52: #{tpu_custom_call.1} parent=43 // pred_fallthru
          _
        %s249 = smul.u32 2, %s19
        %p250 = scmp.lt.s32.totalorder %s249, 3
        %s251 = scalar_select %p250, %s249, 3
        %s252 = smul.addr %s251, 8
        %s253 = scalar_lea.vmem %s0, %s252
        %p254 = pneg %p40
        %p255 = pneg %p37
        %p256 = pneg %p61
        %p257 = pneg %p58
        %p258 = pneg %p82
        %p259 = pneg %p79
        %p260 = pneg %p103
        %p261 = pneg %p100
        %p262 = pneg %p124
        %p263 = pneg %p121
        %p264 = pneg %p145
        %p265 = pneg %p142
        %p266 = pneg %p171
        %p267 = pneg %p168
        %s268 = smul.u32 2, %s19
        %p269 = scmp.lt.s32.totalorder %s268, 3
        %s270 = scalar_select %p269, %s268, 3
        %s271 = smul.addr %s270, 8
        %s272 = scalar_lea.vmem %s6, %s271
        %s273 = smul.u32 2, %s19
        %p274 = scmp.lt.s32.totalorder %s273, 3
        %s275 = scalar_select %p274, %s273, 3
        %s276 = smul.addr %s275, 8
        %s277 = scalar_lea.vmem %s0, %s276
        %s278 = smul.u32 2, %s19
        %s279 = smul.u32 2, %s19
        %p280 = scmp.lt.s32.totalorder %s279, 3
        %s281 = scalar_select %p280, %s279, 3
        %s282 = smul.addr %s281, 8
        %s283 = scalar_lea.vmem %s6, %s282
        %s284 = smul.u32 2, %s19
        %v285 = vld [vmem:[%s277] sm:$0xff]
        %v286 = vld [vmem:[%s277 + $0x8] sm:$0xff]
        %v287 = vld [vmem:[#allocation2] sm:$0xff]
        %v288 = vld [vmem:[#allocation2 + $0x8] sm:$0xff]
        %v289 = vld [vmem:[#allocation2 + $0x10] sm:$0xff]
        %v290 = vld [vmem:[#allocation2 + $0x20] sm:$0xff]
        %v291 = vld [vmem:[#allocation2 + $0x28] sm:$0xff]
        %v292 = vld [vmem:[#allocation2 + $0x30] sm:$0xff]
        %v293 = vld [vmem:[%s3] sm:$0x7]
        %v295 = vlaneseq
        %v296 = vshrl.u32 %v295, 7
        %v297 = vsub.s32 0, %v296
        %v298 = vrot.slane %v293, %v297
        %v299 = vlaneseq
        %v300 = vshrl.u32 %v299, 7
        %v301 = vsub.s32 1, %v300
        %v302 = vrot.slane %v293, %v301
        %v303 = vlaneseq
        %v304 = vshrl.u32 %v303, 7
        %v305 = vsub.s32 2, %v304
        %v306 = vrot.slane %v293, %v305
        %vm310 = vcmask 130048
        %v312 = vsel %vm310, %v285, 0
        %v315 = vsel %vm310, %v286, 0
        %317 = vmatprep.subr.mxu0 %v288
        %318 = vmatpush1.msra.mxu0 %v287
        %319 = vmatprep.subr.mxu0 %v291
        %320 = vmatpush1.msra.mxu0 %v290
        %321 = vmatprep.subr.mxu0 0.0
        %322 = vmatpush1.msra.mxu0 0.0
        %323 = vmatprep.subr.mxu0 0.0
        %324 = vmatpush1.msra.mxu0 0.0
        %325 = vmatprep.subr.mxu0 0.0
        %326 = vmatpush1.msra.mxu0 0.0
        %327 = vmatprep.subr.mxu0 0.0
        %328 = vmatpush1.msra.mxu0 0.0
        %329 = vmatprep.subr.mxu0 0.0
        %330 = vmatpush1.msra.mxu0 0.0
        %331 = vmatprep.subr.mxu0 0.0
        %332 = vmatpush1.msra.mxu0 0.0
        %333 = vmatprep.subr.mxu0 0.0
        %334 = vmatpush1.msra.mxu0 0.0
        %335 = vmatprep.subr.mxu0 0.0
        %336 = vmatpush1.msra.mxu0 0.0
        %337 = vmatprep.subr.mxu0 0.0
        %338 = vmatpush1.msra.mxu0 0.0
        %339 = vmatprep.subr.mxu0 0.0
        %340 = vmatpush1.msra.mxu0 0.0
        %341 = vmatprep.subr.mxu0 0.0
        %342 = vmatpush1.msra.mxu0 0.0
        %343 = vmatprep.subr.mxu0 0.0
        %344 = vmatpush1.msra.mxu0 0.0
        %345 = vmatprep.subr.mxu0 0.0
        %346 = vmatpush1.msra.mxu0 0.0
        %347 = vmatprep.subr.mxu0 0.0
        %348 = vmatpush1.msra.mxu0 0.0
        %349 = vmatprep.subr.mxu0 0.0
        %350 = vmatpush1.msra.mxu0 0.0
        %351 = vmatprep.subr.mxu0 0.0
        %352 = vmatpush1.msra.mxu0 0.0
        %353 = vmatprep.subr.mxu0 0.0
        %354 = vmatpush1.msra.mxu0 0.0
        %355 = vmatprep.subr.mxu0 0.0
        %356 = vmatpush1.msra.mxu0 0.0
        %357 = vmatprep.subr.mxu0 0.0
        %358 = vmatpush1.msra.mxu0 0.0
        %359 = vmatprep.subr.mxu0 0.0
        %360 = vmatpush1.msra.mxu0 0.0
        %361 = vmatprep.subr.mxu0 0.0
        %362 = vmatpush1.msra.mxu0 0.0
        %363 = vmatprep.subr.mxu0 0.0
        %364 = vmatpush1.msra.mxu0 0.0
        %365 = vmatprep.subr.mxu0 0.0
        %366 = vmatpush1.msra.mxu0 0.0
        %367 = vmatprep.subr.mxu0 0.0
        %368 = vmatpush1.msra.mxu0 0.0
        %369 = vmatprep.subr.mxu0 0.0
        %370 = vmatpush1.msra.mxu0 0.0
        %371 = vmatprep.subr.mxu0 0.0
        %372 = vmatpush1.msra.mxu0 0.0
        %373 = vmatprep.subr.mxu0 0.0
        %374 = vmatpush1.msra.mxu0 0.0
        %375 = vmatprep.subr.mxu0 0.0
        %376 = vmatpush1.msra.mxu0 0.0
        %377 = vmatprep.subr.mxu0 0.0
        %378 = vmatpush1.msra.mxu0 0.0
        %379 = vmatprep.subr.mxu0 0.0
        %380 = vmatpush1.msra.mxu0 0.0
        %381 = vmatprep.mubr.f32.mxu0 0.0
        %382 = vmatmul.mubr.f32.gmra.mrb[0].mxu0 %v312
        %v383 = vpop.f32.mrb[0].mxu0
        %v384 = vadd.f32 %v298, %v383
        %v385 = vpop.f32.mrb[0].mxu0
        %v386 = vadd.f32 %v302, %v385
        %387 = vmatprep.mubr.f32.mxu0 0.0
        %388 = vmatmul.mubr.f32.gmra.mrb[0].mxu0 %v315
        %v389 = vpop.f32.mrb[0].mxu0
        %v390 = vadd.f32 %v298, %v389
        %v391 = vpop.f32.mrb[0].mxu0
        %v392 = vadd.f32 %v302, %v391
        %393 = vdwg.mxu0
        %394 = vmatprep.subr.mxu0 0.0
        %395 = vmatpush1.msra.mxu0 %v289
        %396 = vmatprep.subr.mxu0 0.0
        %397 = vmatpush1.msra.mxu0 %v292
        %398 = vmatprep.subr.mxu0 0.0
        %399 = vmatpush1.msra.mxu0 0.0
        %400 = vmatprep.subr.mxu0 0.0
        %401 = vmatpush1.msra.mxu0 0.0
        %402 = vmatprep.subr.mxu0 0.0
        %403 = vmatpush1.msra.mxu0 0.0
        %404 = vmatprep.subr.mxu0 0.0
        %405 = vmatpush1.msra.mxu0 0.0
        %406 = vmatprep.subr.mxu0 0.0
        %407 = vmatpush1.msra.mxu0 0.0
        %408 = vmatprep.subr.mxu0 0.0
        %409 = vmatpush1.msra.mxu0 0.0
        %410 = vmatprep.subr.mxu0 0.0
        %411 = vmatpush1.msra.mxu0 0.0
        %412 = vmatprep.subr.mxu0 0.0
        %413 = vmatpush1.msra.mxu0 0.0
        %414 = vmatprep.subr.mxu0 0.0
        %415 = vmatpush1.msra.mxu0 0.0
        %416 = vmatprep.subr.mxu0 0.0
        %417 = vmatpush1.msra.mxu0 0.0
        %418 = vmatprep.subr.mxu0 0.0
        %419 = vmatpush1.msra.mxu0 0.0
        %420 = vmatprep.subr.mxu0 0.0
        %421 = vmatpush1.msra.mxu0 0.0
        %422 = vmatprep.subr.mxu0 0.0
        %423 = vmatpush1.msra.mxu0 0.0
        %424 = vmatprep.subr.mxu0 0.0
        %425 = vmatpush1.msra.mxu0 0.0
        %426 = vmatprep.subr.mxu0 0.0
        %427 = vmatpush1.msra.mxu0 0.0
        %428 = vmatprep.subr.mxu0 0.0
        %429 = vmatpush1.msra.mxu0 0.0
        %430 = vmatprep.subr.mxu0 0.0
        %431 = vmatpush1.msra.mxu0 0.0
        %432 = vmatprep.subr.mxu0 0.0
        %433 = vmatpush1.msra.mxu0 0.0
        %434 = vmatprep.subr.mxu0 0.0
        %435 = vmatpush1.msra.mxu0 0.0
        %436 = vmatprep.subr.mxu0 0.0
        %437 = vmatpush1.msra.mxu0 0.0
        %438 = vmatprep.subr.mxu0 0.0
        %439 = vmatpush1.msra.mxu0 0.0
        %440 = vmatprep.subr.mxu0 0.0
        %441 = vmatpush1.msra.mxu0 0.0
        %442 = vmatprep.subr.mxu0 0.0
        %443 = vmatpush1.msra.mxu0 0.0
        %444 = vmatprep.subr.mxu0 0.0
        %445 = vmatpush1.msra.mxu0 0.0
        %446 = vmatprep.subr.mxu0 0.0
        %447 = vmatpush1.msra.mxu0 0.0
        %448 = vmatprep.subr.mxu0 0.0
        %449 = vmatpush1.msra.mxu0 0.0
        %450 = vmatprep.subr.mxu0 0.0
        %451 = vmatpush1.msra.mxu0 0.0
        %452 = vmatprep.subr.mxu0 0.0
        %453 = vmatpush1.msra.mxu0 0.0
        %454 = vmatprep.subr.mxu0 0.0
        %455 = vmatpush1.msra.mxu0 0.0
        %456 = vmatprep.subr.mxu0 0.0
        %457 = vmatpush1.msra.mxu0 0.0
        %458 = vmatprep.mubr.f32.mxu0 0.0
        %459 = vmatmul.mubr.f32.gmra.mrb[0].mxu0 %v312
        %v460 = vpop.f32.mrb[0].mxu0
        %v461 = vadd.f32 %v306, %v460
        %v462 = vpop.f32.mrb[0].mxu0
        %463 = vmatprep.mubr.f32.mxu0 0.0
        %464 = vmatmul.mubr.f32.gmra.mrb[0].mxu0 %v315
        %v465 = vpop.f32.mrb[0].mxu0
        %v466 = vadd.f32 %v306, %v465
        %v467 = vpop.f32.mrb[0].mxu0
        %468 = vdwg.mxu0
        %vm469 = vcmask 261120
        %v471 = vsel %vm469, %v384, 0
        %v474 = vsel %vm469, %v390, 0
        %v477 = vsel %vm469, %v386, 0
        %v480 = vsel %vm469, %v392, 0
        %482 = vmatprep.subr.mxu0 0.0
        %483 = vmatpush1.xpose.msra.mxu0 %v477
        %484 = vmatprep.subr.mxu0 0.0
        %485 = vmatpush1.xpose.msra.mxu0 %v480
        %486 = vmatprep.subr.mxu0 0.0
        %487 = vmatpush1.xpose.msra.mxu0 0.0
        %488 = vmatprep.subr.mxu0 0.0
        %489 = vmatpush1.xpose.msra.mxu0 0.0
        %490 = vmatprep.subr.mxu0 0.0
        %491 = vmatpush1.xpose.msra.mxu0 0.0
        %492 = vmatprep.subr.mxu0 0.0
        %493 = vmatpush1.xpose.msra.mxu0 0.0
        %494 = vmatprep.subr.mxu0 0.0
        %495 = vmatpush1.xpose.msra.mxu0 0.0
        %496 = vmatprep.subr.mxu0 0.0
        %497 = vmatpush1.xpose.msra.mxu0 0.0
        %498 = vmatprep.subr.mxu0 0.0
        %499 = vmatpush1.xpose.msra.mxu0 0.0
        %500 = vmatprep.subr.mxu0 0.0
        %501 = vmatpush1.xpose.msra.mxu0 0.0
        %502 = vmatprep.subr.mxu0 0.0
        %503 = vmatpush1.xpose.msra.mxu0 0.0
        %504 = vmatprep.subr.mxu0 0.0
        %505 = vmatpush1.xpose.msra.mxu0 0.0
        %506 = vmatprep.subr.mxu0 0.0
        %507 = vmatpush1.xpose.msra.mxu0 0.0
        %508 = vmatprep.subr.mxu0 0.0
        %509 = vmatpush1.xpose.msra.mxu0 0.0
        %510 = vmatprep.subr.mxu0 0.0
        %511 = vmatpush1.xpose.msra.mxu0 0.0
        %512 = vmatprep.subr.mxu0 0.0
        %513 = vmatpush1.xpose.msra.mxu0 0.0
        %514 = vmatprep.subr.mxu0 0.0
        %515 = vmatpush1.xpose.msra.mxu0 0.0
        %516 = vmatprep.subr.mxu0 0.0
        %517 = vmatpush1.xpose.msra.mxu0 0.0
        %518 = vmatprep.subr.mxu0 0.0
        %519 = vmatpush1.xpose.msra.mxu0 0.0
        %520 = vmatprep.subr.mxu0 0.0
        %521 = vmatpush1.xpose.msra.mxu0 0.0
        %522 = vmatprep.subr.mxu0 0.0
        %523 = vmatpush1.xpose.msra.mxu0 0.0
        %524 = vmatprep.subr.mxu0 0.0
        %525 = vmatpush1.xpose.msra.mxu0 0.0
        %526 = vmatprep.subr.mxu0 0.0
        %527 = vmatpush1.xpose.msra.mxu0 0.0
        %528 = vmatprep.subr.mxu0 0.0
        %529 = vmatpush1.xpose.msra.mxu0 0.0
        %530 = vmatprep.subr.mxu0 0.0
        %531 = vmatpush1.xpose.msra.mxu0 0.0
        %532 = vmatprep.subr.mxu0 0.0
        %533 = vmatpush1.xpose.msra.mxu0 0.0
        %534 = vmatprep.subr.mxu0 0.0
        %535 = vmatpush1.xpose.msra.mxu0 0.0
        %536 = vmatprep.subr.mxu0 0.0
        %537 = vmatpush1.xpose.msra.mxu0 0.0
        %538 = vmatprep.subr.mxu0 0.0
        %539 = vmatpush1.xpose.msra.mxu0 0.0
        %540 = vmatprep.subr.mxu0 0.0
        %541 = vmatpush1.xpose.msra.mxu0 0.0
        %542 = vmatprep.subr.mxu0 0.0
        %543 = vmatpush1.xpose.msra.mxu0 0.0
        %544 = vmatprep.subr.mxu0 0.0
        %545 = vmatpush1.xpose.msra.mxu0 0.0
        %546 = vmatprep.mubr.f32.mxu0 0.0
        %547 = vmatmul.mubr.f32.gmra.mrb[0].mxu0 %v471
        %v548 = vpop.f32.mrb[0].mxu0
        %v549 = vadd.f32 0.0, %v548
        %v550 = vpop.f32.mrb[0].mxu0
        %551 = vmatprep.mubr.f32.mxu0 0.0
        %552 = vmatmul.mubr.f32.gmra.mrb[0].mxu0 %v474
        %v553 = vpop.f32.mrb[0].mxu0
        %v554 = vadd.f32 0.0, %v553
        %v555 = vpop.f32.mrb[0].mxu0
        %556 = vdwg.mxu0
        %v557 = vmul.f32 %v549, 0.17677669
        %v558 = vmul.f32 %v554, 0.17677669
        %v559 = vld [vmem:[%s5] sm:$0xff]
        %v560 = vld [vmem:[%s5 + $0x8] sm:$0xff]
        %v561 = vadd.f32 %v557, %v559
        %v562 = vadd.f32 %v558, %v560
        %v563 = vsel %vm310, %v561, -inf
        %564 = vmax.xlane.f32.xlu0 %v563
        %v565 = vpop.xlane.xlu0 %564
        %v566 = vsel %vm310, %v562, -inf
        %567 = vmax.xlane.f32.xlu0 %v566
        %v568 = vpop.xlane.xlu0 %567
        %v569 = vsub.f32 %v561, %v565
        %v570 = vsub.f32 %v562, %v568
        %v571 = vmul.f32 %v569, 1.442695
        %v572 = vpow.pop %v571
        %v573 = vmul.f32 %v570, 1.442695
        %v574 = vpow.pop %v573
        %v575 = vsel %vm310, %v572, 0.0
        %576 = vadd.xlane.f32.xlu0 %v575
        %v577 = vpop.xlane.xlu0 %576
        %v578 = vsel %vm310, %v574, 0.0
        %579 = vadd.xlane.f32.xlu0 %v578
        %v580 = vpop.xlane.xlu0 %579
        %v581 = vrcp.pop %v577
        %v582 = vrcp.pop %v580
        %v583 = vmul.f32 %v572, %v581
        %v584 = vmul.f32 %v574, %v582
        %v586 = vsel %vm310, %v583, 0
        %v589 = vsel %vm310, %v584, 0
        %591 = vmatprep.subr.mxu0 0.0
        %592 = vmatpush1.msra.mxu0 %v461
        %593 = vmatprep.subr.mxu0 0.0
        %594 = vmatpush1.msra.mxu0 %v466
        %595 = vmatprep.subr.mxu0 0.0
        %596 = vmatpush1.msra.mxu0 0.0
        %597 = vmatprep.subr.mxu0 0.0
        %598 = vmatpush1.msra.mxu0 0.0
        %599 = vmatprep.subr.mxu0 0.0
        %600 = vmatpush1.msra.mxu0 0.0
        %601 = vmatprep.subr.mxu0 0.0
        %602 = vmatpush1.msra.mxu0 0.0
        %603 = vmatprep.subr.mxu0 0.0
        %604 = vmatpush1.msra.mxu0 0.0
        %605 = vmatprep.subr.mxu0 0.0
        %606 = vmatpush1.msra.mxu0 0.0
        %607 = vmatprep.subr.mxu0 0.0
        %608 = vmatpush1.msra.mxu0 0.0
        %609 = vmatprep.subr.mxu0 0.0
        %610 = vmatpush1.msra.mxu0 0.0
        %611 = vmatprep.subr.mxu0 0.0
        %612 = vmatpush1.msra.mxu0 0.0
        %613 = vmatprep.subr.mxu0 0.0
        %614 = vmatpush1.msra.mxu0 0.0
        %615 = vmatprep.subr.mxu0 0.0
        %616 = vmatpush1.msra.mxu0 0.0
        %617 = vmatprep.subr.mxu0 0.0
        %618 = vmatpush1.msra.mxu0 0.0
        %619 = vmatprep.subr.mxu0 0.0
        %620 = vmatpush1.msra.mxu0 0.0
        %621 = vmatprep.subr.mxu0 0.0
        %622 = vmatpush1.msra.mxu0 0.0
        %623 = vmatprep.subr.mxu0 0.0
        %624 = vmatpush1.msra.mxu0 0.0
        %625 = vmatprep.subr.mxu0 0.0
        %626 = vmatpush1.msra.mxu0 0.0
        %627 = vmatprep.subr.mxu0 0.0
        %628 = vmatpush1.msra.mxu0 0.0
        %629 = vmatprep.subr.mxu0 0.0
        %630 = vmatpush1.msra.mxu0 0.0
        %631 = vmatprep.subr.mxu0 0.0
        %632 = vmatpush1.msra.mxu0 0.0
        %633 = vmatprep.subr.mxu0 0.0
        %634 = vmatpush1.msra.mxu0 0.0
        %635 = vmatprep.subr.mxu0 0.0
        %636 = vmatpush1.msra.mxu0 0.0
        %637 = vmatprep.subr.mxu0 0.0
        %638 = vmatpush1.msra.mxu0 0.0
        %639 = vmatprep.subr.mxu0 0.0
        %640 = vmatpush1.msra.mxu0 0.0
        %641 = vmatprep.subr.mxu0 0.0
        %642 = vmatpush1.msra.mxu0 0.0
        %643 = vmatprep.subr.mxu0 0.0
        %644 = vmatpush1.msra.mxu0 0.0
        %645 = vmatprep.subr.mxu0 0.0
        %646 = vmatpush1.msra.mxu0 0.0
        %647 = vmatprep.subr.mxu0 0.0
        %648 = vmatpush1.msra.mxu0 0.0
        %649 = vmatprep.subr.mxu0 0.0
        %650 = vmatpush1.msra.mxu0 0.0
        %651 = vmatprep.subr.mxu0 0.0
        %652 = vmatpush1.msra.mxu0 0.0
        %653 = vmatprep.subr.mxu0 0.0
        %654 = vmatpush1.msra.mxu0 0.0
        %655 = vmatprep.mubr.f32.mxu0 0.0
        %656 = vmatmul.mubr.f32.gmra.mrb[0].mxu0 %v586
        %v657 = vpop.f32.mrb[0].mxu0
        %v658 = vadd.f32 0.0, %v657
        %v659 = vpop.f32.mrb[0].mxu0
        %660 = vmatprep.mubr.f32.mxu0 0.0
        %661 = vmatmul.mubr.f32.gmra.mrb[0].mxu0 %v589
        %v662 = vpop.f32.mrb[0].mxu0
        %v663 = vadd.f32 0.0, %v662
        %v664 = vpop.f32.mrb[0].mxu0
        %665 = vdwg.mxu0
        %v666 = vld [vmem:[#allocation4] sm:$0xff]
        %v667 = vld [vmem:[#allocation4 + $0x10] sm:$0xff]
        %v668 = vld [vmem:[#allocation4 + $0x20] sm:$0xff]
        %v669 = vld [vmem:[#allocation4 + $0x30] sm:$0xff]
        %v670 = vld [vmem:[%s4] sm:$0x1]
        %v672 = vlaneseq
        %v673 = vshrl.u32 %v672, 7
        %v674 = vsub.s32 0, %v673
        %v675 = vrot.slane %v670, %v674
        %v678 = vsel %vm469, %v658, 0
        %v681 = vsel %vm469, %v663, 0
        %683 = vmatprep.subr.mxu0 0.0
        %684 = vmatpush1.msra.mxu0 %v666
        %685 = vmatprep.subr.mxu0 0.0
        %686 = vmatpush1.msra.mxu0 %v667
        %687 = vmatprep.subr.mxu0 0.0
        %688 = vmatpush1.msra.mxu0 %v668
        %689 = vmatprep.subr.mxu0 0.0
        %690 = vmatpush1.msra.mxu0 %v669
        %691 = vmatprep.subr.mxu0 0.0
        %692 = vmatpush1.msra.mxu0 0.0
        %693 = vmatprep.subr.mxu0 0.0
        %694 = vmatpush1.msra.mxu0 0.0
        %695 = vmatprep.subr.mxu0 0.0
        %696 = vmatpush1.msra.mxu0 0.0
        %697 = vmatprep.subr.mxu0 0.0
        %698 = vmatpush1.msra.mxu0 0.0
        %699 = vmatprep.subr.mxu0 0.0
        %700 = vmatpush1.msra.mxu0 0.0
        %701 = vmatprep.subr.mxu0 0.0
        %702 = vmatpush1.msra.mxu0 0.0
        %703 = vmatprep.subr.mxu0 0.0
        %704 = vmatpush1.msra.mxu0 0.0
        %705 = vmatprep.subr.mxu0 0.0
        %706 = vmatpush1.msra.mxu0 0.0
        %707 = vmatprep.subr.mxu0 0.0
        %708 = vmatpush1.msra.mxu0 0.0
        %709 = vmatprep.subr.mxu0 0.0
        %710 = vmatpush1.msra.mxu0 0.0
        %711 = vmatprep.subr.mxu0 0.0
        %712 = vmatpush1.msra.mxu0 0.0
        %713 = vmatprep.subr.mxu0 0.0
        %714 = vmatpush1.msra.mxu0 0.0
        %715 = vmatprep.subr.mxu0 0.0
        %716 = vmatpush1.msra.mxu0 0.0
        %717 = vmatprep.subr.mxu0 0.0
        %718 = vmatpush1.msra.mxu0 0.0
        %719 = vmatprep.subr.mxu0 0.0
        %720 = vmatpush1.msra.mxu0 0.0
        %721 = vmatprep.subr.mxu0 0.0
        %722 = vmatpush1.msra.mxu0 0.0
        %723 = vmatprep.subr.mxu0 0.0
        %724 = vmatpush1.msra.mxu0 0.0
        %725 = vmatprep.subr.mxu0 0.0
        %726 = vmatpush1.msra.mxu0 0.0
        %727 = vmatprep.subr.mxu0 0.0
        %728 = vmatpush1.msra.mxu0 0.0
        %729 = vmatprep.subr.mxu0 0.0
        %730 = vmatpush1.msra.mxu0 0.0
        %731 = vmatprep.subr.mxu0 0.0
        %732 = vmatpush1.msra.mxu0 0.0
        %733 = vmatprep.subr.mxu0 0.0
        %734 = vmatpush1.msra.mxu0 0.0
        %735 = vmatprep.subr.mxu0 0.0
        %736 = vmatpush1.msra.mxu0 0.0
        %737 = vmatprep.subr.mxu0 0.0
        %738 = vmatpush1.msra.mxu0 0.0
        %739 = vmatprep.subr.mxu0 0.0
        %740 = vmatpush1.msra.mxu0 0.0
        %741 = vmatprep.subr.mxu0 0.0
        %742 = vmatpush1.msra.mxu0 0.0
        %743 = vmatprep.subr.mxu0 0.0
        %744 = vmatpush1.msra.mxu0 0.0
        %745 = vmatprep.subr.mxu0 0.0
        %746 = vmatpush1.msra.mxu0 0.0
        %747 = vmatprep.mubr.f32.mxu0 0.0
        %748 = vmatmul.mubr.f32.gmra.mrb[0].mxu0 %v678
        %v749 = vpop.f32.mrb[0].mxu0
        %v750 = vadd.f32 %v675, %v749
        %v751 = vpop.f32.mrb[0].mxu0
        %752 = vmatprep.mubr.f32.mxu0 0.0
        %753 = vmatmul.mubr.f32.gmra.mrb[0].mxu0 %v681
        %v754 = vpop.f32.mrb[0].mxu0
        %v755 = vadd.f32 %v675, %v754
        %v756 = vpop.f32.mrb[0].mxu0
        %757 = vdwg.mxu0
        %v758 = vadd.f32 %v750, %v285
        %v759 = vadd.f32 %v755, %v286
        %v760 = vld [vmem:[#allocation2 + $0x18] sm:$0xff]
        %v761 = vld [vmem:[#allocation2 + $0x38] sm:$0xff]
        %v762 = vld [vmem:[%s3 + $0x3] sm:$0x1]
        %v764 = vlaneseq
        %v765 = vshrl.u32 %v764, 7
        %v766 = vsub.s32 0, %v765
        %v767 = vrot.slane %v762, %v766
        %v770 = vsel %vm310, %v758, 0
        %v773 = vsel %vm310, %v759, 0
        %775 = vmatprep.subr.mxu0 0.0
        %776 = vmatpush1.msra.mxu0 %v760
        %777 = vmatprep.subr.mxu0 0.0
        %778 = vmatpush1.msra.mxu0 %v761
        %779 = vmatprep.subr.mxu0 0.0
        %780 = vmatpush1.msra.mxu0 0.0
        %781 = vmatprep.subr.mxu0 0.0
        %782 = vmatpush1.msra.mxu0 0.0
        %783 = vmatprep.subr.mxu0 0.0
        %784 = vmatpush1.msra.mxu0 0.0
        %785 = vmatprep.subr.mxu0 0.0
        %786 = vmatpush1.msra.mxu0 0.0
        %787 = vmatprep.subr.mxu0 0.0
        %788 = vmatpush1.msra.mxu0 0.0
        %789 = vmatprep.subr.mxu0 0.0
        %790 = vmatpush1.msra.mxu0 0.0
        %791 = vmatprep.subr.mxu0 0.0
        %792 = vmatpush1.msra.mxu0 0.0
        %793 = vmatprep.subr.mxu0 0.0
        %794 = vmatpush1.msra.mxu0 0.0
        %795 = vmatprep.subr.mxu0 0.0
        %796 = vmatpush1.msra.mxu0 0.0
        %797 = vmatprep.subr.mxu0 0.0
        %798 = vmatpush1.msra.mxu0 0.0
        %799 = vmatprep.subr.mxu0 0.0
        %800 = vmatpush1.msra.mxu0 0.0
        %801 = vmatprep.subr.mxu0 0.0
        %802 = vmatpush1.msra.mxu0 0.0
        %803 = vmatprep.subr.mxu0 0.0
        %804 = vmatpush1.msra.mxu0 0.0
        %805 = vmatprep.subr.mxu0 0.0
        %806 = vmatpush1.msra.mxu0 0.0
        %807 = vmatprep.subr.mxu0 0.0
        %808 = vmatpush1.msra.mxu0 0.0
        %809 = vmatprep.subr.mxu0 0.0
        %810 = vmatpush1.msra.mxu0 0.0
        %811 = vmatprep.subr.mxu0 0.0
        %812 = vmatpush1.msra.mxu0 0.0
        %813 = vmatprep.subr.mxu0 0.0
        %814 = vmatpush1.msra.mxu0 0.0
        %815 = vmatprep.subr.mxu0 0.0
        %816 = vmatpush1.msra.mxu0 0.0
        %817 = vmatprep.subr.mxu0 0.0
        %818 = vmatpush1.msra.mxu0 0.0
        %819 = vmatprep.subr.mxu0 0.0
        %820 = vmatpush1.msra.mxu0 0.0
        %821 = vmatprep.subr.mxu0 0.0
        %822 = vmatpush1.msra.mxu0 0.0
        %823 = vmatprep.subr.mxu0 0.0
        %824 = vmatpush1.msra.mxu0 0.0
        %825 = vmatprep.subr.mxu0 0.0
        %826 = vmatpush1.msra.mxu0 0.0
        %827 = vmatprep.subr.mxu0 0.0
        %828 = vmatpush1.msra.mxu0 0.0
        %829 = vmatprep.subr.mxu0 0.0
        %830 = vmatpush1.msra.mxu0 0.0
        %831 = vmatprep.subr.mxu0 0.0
        %832 = vmatpush1.msra.mxu0 0.0
        %833 = vmatprep.subr.mxu0 0.0
        %834 = vmatpush1.msra.mxu0 0.0
        %835 = vmatprep.subr.mxu0 0.0
        %836 = vmatpush1.msra.mxu0 0.0
        %837 = vmatprep.subr.mxu0 0.0
        %838 = vmatpush1.msra.mxu0 0.0
        %839 = vmatprep.mubr.f32.mxu0 0.0
        %840 = vmatmul.mubr.f32.gmra.mrb[0].mxu0 %v770
        %v841 = vpop.f32.mrb[0].mxu0
        %v842 = vadd.f32 %v767, %v841
        %v843 = vpop.f32.mrb[0].mxu0
        %844 = vmatprep.mubr.f32.mxu0 0.0
        %845 = vmatmul.mubr.f32.gmra.mrb[0].mxu0 %v773
        %v846 = vpop.f32.mrb[0].mxu0
        %v847 = vadd.f32 %v767, %v846
        %v848 = vpop.f32.mrb[0].mxu0
        %849 = vdwg.mxu0
        %vm850 = vcmp.gt.f32.partialorder %v842, 0.0
        %vm851 = vcmp.gt.f32.partialorder %v847, 0.0
        %v852 = vmul.f32 %v842, 0.2
        %v853 = vmul.f32 %v847, 0.2
        %v854 = vsel %vm850, %v842, %v852
        %v855 = vsel %vm851, %v847, %v853
        %v856 = vld [vmem:[#allocation4 + $0x8] sm:$0xff]
        %v857 = vld [vmem:[#allocation4 + $0x18] sm:$0xff]
        %v858 = vld [vmem:[#allocation4 + $0x28] sm:$0xff]
        %v859 = vld [vmem:[#allocation4 + $0x38] sm:$0xff]
        %v860 = vld [vmem:[%s4 + $0x1] sm:$0x1]
        %v862 = vlaneseq
        %v863 = vshrl.u32 %v862, 7
        %v864 = vsub.s32 0, %v863
        %v865 = vrot.slane %v860, %v864
        %v868 = vsel %vm469, %v854, 0
        %v871 = vsel %vm469, %v855, 0
        %873 = vmatprep.subr.mxu0 0.0
        %874 = vmatpush1.msra.mxu0 %v856
        %875 = vmatprep.subr.mxu0 0.0
        %876 = vmatpush1.msra.mxu0 %v857
        %877 = vmatprep.subr.mxu0 0.0
        %878 = vmatpush1.msra.mxu0 %v858
        %879 = vmatprep.subr.mxu0 0.0
        %880 = vmatpush1.msra.mxu0 %v859
        %881 = vmatprep.subr.mxu0 0.0
        %882 = vmatpush1.msra.mxu0 0.0
        %883 = vmatprep.subr.mxu0 0.0
        %884 = vmatpush1.msra.mxu0 0.0
        %885 = vmatprep.subr.mxu0 0.0
        %886 = vmatpush1.msra.mxu0 0.0
        %887 = vmatprep.subr.mxu0 0.0
        %888 = vmatpush1.msra.mxu0 0.0
        %889 = vmatprep.subr.mxu0 0.0
        %890 = vmatpush1.msra.mxu0 0.0
        %891 = vmatprep.subr.mxu0 0.0
        %892 = vmatpush1.msra.mxu0 0.0
        %893 = vmatprep.subr.mxu0 0.0
        %894 = vmatpush1.msra.mxu0 0.0
        %895 = vmatprep.subr.mxu0 0.0
        %896 = vmatpush1.msra.mxu0 0.0
        %897 = vmatprep.subr.mxu0 0.0
        %898 = vmatpush1.msra.mxu0 0.0
        %899 = vmatprep.subr.mxu0 0.0
        %900 = vmatpush1.msra.mxu0 0.0
        %901 = vmatprep.subr.mxu0 0.0
        %902 = vmatpush1.msra.mxu0 0.0
        %903 = vmatprep.subr.mxu0 0.0
        %904 = vmatpush1.msra.mxu0 0.0
        %905 = vmatprep.subr.mxu0 0.0
        %906 = vmatpush1.msra.mxu0 0.0
        %907 = vmatprep.subr.mxu0 0.0
        %908 = vmatpush1.msra.mxu0 0.0
        %909 = vmatprep.subr.mxu0 0.0
        %910 = vmatpush1.msra.mxu0 0.0
        %911 = vmatprep.subr.mxu0 0.0
        %912 = vmatpush1.msra.mxu0 0.0
        %913 = vmatprep.subr.mxu0 0.0
        %914 = vmatpush1.msra.mxu0 0.0
        %915 = vmatprep.subr.mxu0 0.0
        %916 = vmatpush1.msra.mxu0 0.0
        %917 = vmatprep.subr.mxu0 0.0
        %918 = vmatpush1.msra.mxu0 0.0
        %919 = vmatprep.subr.mxu0 0.0
        %920 = vmatpush1.msra.mxu0 0.0
        %921 = vmatprep.subr.mxu0 0.0
        %922 = vmatpush1.msra.mxu0 0.0
        %923 = vmatprep.subr.mxu0 0.0
        %924 = vmatpush1.msra.mxu0 0.0
        %925 = vmatprep.subr.mxu0 0.0
        %926 = vmatpush1.msra.mxu0 0.0
        %927 = vmatprep.subr.mxu0 0.0
        %928 = vmatpush1.msra.mxu0 0.0
        %929 = vmatprep.subr.mxu0 0.0
        %930 = vmatpush1.msra.mxu0 0.0
        %931 = vmatprep.subr.mxu0 0.0
        %932 = vmatpush1.msra.mxu0 0.0
        %933 = vmatprep.subr.mxu0 0.0
        %934 = vmatpush1.msra.mxu0 0.0
        %935 = vmatprep.subr.mxu0 0.0
        %936 = vmatpush1.msra.mxu0 0.0
        %937 = vmatprep.mubr.f32.mxu0 0.0
        %938 = vmatmul.mubr.f32.gmra.mrb[0].mxu0 %v868
        %v939 = vpop.f32.mrb[0].mxu0
        %v940 = vadd.f32 %v865, %v939
        %v941 = vpop.f32.mrb[0].mxu0
        %942 = vmatprep.mubr.f32.mxu0 0.0
        %943 = vmatmul.mubr.f32.gmra.mrb[0].mxu0 %v871
        %v944 = vpop.f32.mrb[0].mxu0
        %v945 = vadd.f32 %v865, %v944
        %v946 = vpop.f32.mrb[0].mxu0
        %947 = vdwg.mxu0
        %v948 = vadd.f32 %v940, %v758
        %v949 = vadd.f32 %v945, %v759
        %950 = vst.msk [vmem:[%s283] sm:$0xff] %vm310, %v948
        %951 = vst.msk [vmem:[%s283 + $0x8] sm:$0xff] %vm310, %v949
        %s952 = smul.u32 2, %s19
        %p953 = scmp.lt.s32.totalorder %s952, 3
        %s954 = scalar_select %p953, %s952, 3
        %s955 = smul.addr %s954, 8
        %s956 = scalar_lea.vmem %s6, %s955
        // Predicated region
        $region53: #{tpu_custom_call.1} parent=43 // pred_check
          %p957 = pneg %p168
        $region54: #{tpu_custom_call.1} parent=43 // pred_check_branch
          %959 = sbr.rel (%p957) target = $region56
        $region55: #{tpu_custom_call.1} parent=43 // pred_region
          %s960 = smul.u32 2, %s19
        $region56: #{tpu_custom_call.1} parent=43 // pred_fallthru
          _
      $region44: #{tpu_custom_call.1} parent=5 // pred_fallthru
        _
      %p961 = scmp.le.s32.totalorder 2, %s14
      // Predicated region
      $region57: #{tpu_custom_call.1} parent=5 // pred_check
        %p962 = pneg %p961
      $region58: #{tpu_custom_call.1} parent=5 // pred_check_branch
        %964 = sbr.rel (%p962) target = $region60
      $region59: #{tpu_custom_call.1} parent=5 // pred_region
        %s965 = ssub.s32 %s14, 2
        // Predicated region
        $region61: #{tpu_custom_call.1} parent=59 // pred_check
          %p966 = pneg %p174
        $region62: #{tpu_custom_call.1} parent=59 // pred_check_branch
          %968 = sbr.rel (%p966) target = $region64
        $region63: #{tpu_custom_call.1} parent=59 // pred_region
          %s969 = smul.u32 2, %s20
          %p970 = scmp.lt.s32.totalorder %s969, 3
          %s971 = scalar_select %p970, %s969, 3
          %s972 = smul.addr %s971, 8
          %s973 = scalar_lea.vmem %s6, %s972
        $region64: #{tpu_custom_call.1} parent=59 // pred_fallthru
          _
      $region60: #{tpu_custom_call.1} parent=5 // pred_fallthru
        _
    $region6: #{tpu_custom_call.1} parent=1 // loop_footer
      %s18 = sadd.s32 1, %s14
    $region7: #{tpu_custom_call.1} parent=1 // loop_footer_branch
      %13 = sbr.rel target = $region3
    $region8: #{tpu_custom_call.1} parent=1 // loop_exit
      _
    %974 = vsyncpa [#allocation3], 1
    %s975 = scalar_lea.sflag [#allocation3], 1
    %976 = vsyncpa %s975, 1
    %977 = vsyncpa [#allocation5], 1

</llo_original>
